<compile_context>
chip_gen: v7x
topology: tpu7x:2x2x1
jax: 0.10.0
libtpu: 0.0.40
codegen_flags: <defaults>
</compile_context>

<pallas_src>
import functools

import jax
import jax.numpy as jnp
from jax.experimental import pallas as pl
from jax.experimental.pallas import tpu as pltpu


def _li_kernel(x_ref, o_ref, mem_ref, *, decay, tt):
    """One (feature-block, time-chunk) grid step.

    x_ref / o_ref : (tt, tm, L) VMEM tiles of the input / output.
    mem_ref       : (tm, L) f32 VMEM carry = membrane at the first step of
                    this chunk, persistent across the sequential time axis.
    """
    t_chunk = pl.program_id(1)  # innermost ("arbitrary") time-chunk axis

    # First chunk of each feature block: membrane starts at zero (out[0] = 0).
    @pl.when(t_chunk == 0)
    def _():
        mem_ref[...] = jnp.zeros_like(mem_ref)

    mem0 = mem_ref[...]
    o_ref[0] = mem0.astype(o_ref.dtype)

    # Steps 1 .. tt-1: running membrane stays in vregs; the "previous input"
    # always comes from inside this chunk, so no per-step carry traffic.
    def body(i, mem):
        new_mem = decay * mem + x_ref[i - 1].astype(jnp.float32)
        o_ref[i] = new_mem.astype(o_ref.dtype)
        return new_mem

    unroll = True if tt <= 64 else 8
    mem_last = jax.lax.fori_loop(1, tt, body, mem0, unroll=unroll)

    # Cross-chunk carry = next chunk's out[0]; one FMA + one store per chunk.
    mem_ref[...] = decay * mem_last + x_ref[tt - 1].astype(jnp.float32)


def _vmem_capacity_bytes():
    """Per-TensorCore VMEM capacity, with a v7x-safe fallback."""
    try:
        cap = getattr(pltpu.get_tpu_info(), "vmem_capacity_bytes", None)
        if cap:
            return int(cap)
    except Exception:
        pass
    return 64 * 1024 * 1024  # conservative: v7x per-TensorCore VMEM


def _choose_time_chunk(t, cap):
    """Largest chunk <= cap, preferring one that divides T exactly."""
    cap = max(1, min(t, cap))
    lo = max(cap // 2, 1)
    for tt in range(cap, lo - 1, -1):
        if t % tt == 0:
            return tt
    return cap  # no nearby divisor: ragged tail handled by Pallas block masking


def li_forward(inputs, tau, *, max_time_chunk=None):
    """Pallas LI forward. inputs: (T, B, N) -> (T, B, N)."""
    T, B, N = inputs.shape
    decay = float(1.0 - 1.0 / tau)             # Python float -> jaxpr literal
    itemsize = jnp.dtype(inputs.dtype).itemsize

    # --- layout: fold (B, N) into dense (M, 128) lane slabs when possible ---
    if (B * N) % 128 == 0:
        M, L = (B * N) // 128, 128
        x = inputs.reshape(T, M, L)            # trailing-dim merge: free
    else:
        # TODO(synk): lane-pad N to a multiple of 128 in the producer to avoid
        # masked partial stores on this fallback path.
        M, L = B, N
        x = inputs

    # --- feature-axis blocking ----------------------------------------------
    # >=2 blocks lets v7x's second TensorCore take half the features; on
    # v5e/v6e the extra grid steps are negligible because the time chunk is big.
    tm = M // 2 if (M >= 16 and M % 16 == 0) else M
    n_m = M // tm

    # --- time-chunk sizing from per-generation VMEM -------------------------
    vmem_limit = min(_vmem_capacity_bytes() * 3 // 4, 96 * 1024 * 1024)
    budget = vmem_limit * 3 // 4               # headroom for scratch / overhead
    tm_pad = -(-tm // 8) * 8
    l_pad = -(-L // 128) * 128
    bytes_per_step = 2 * 2 * tm_pad * l_pad * itemsize  # (in+out) x double-buffer
    cap = max(1, min(T, budget // bytes_per_step, 4096))
    if max_time_chunk is not None:
        cap = max(1, min(cap, int(max_time_chunk)))
    tt = _choose_time_chunk(T, cap)
    nt = pl.cdiv(T, tt)                        # ragged tail => partial last block

    kernel = functools.partial(_li_kernel, decay=decay, tt=tt)

    out = pl.pallas_call(
        kernel,
        out_shape=jax.ShapeDtypeStruct((T, M, L), inputs.dtype),
        grid_spec=pltpu.PrefetchScalarGridSpec(
            num_scalar_prefetch=0,
            grid=(n_m, nt),
            in_specs=[pl.BlockSpec((tt, tm, L), lambda m, t: (t, m, 0))],
            out_specs=pl.BlockSpec((tt, tm, L), lambda m, t: (t, m, 0)),
            scratch_shapes=[pltpu.VMEM((tm, L), jnp.float32)],  # membrane carry
        ),
        compiler_params=pltpu.CompilerParams(
            dimension_semantics=("parallel", "arbitrary"),
            vmem_limit_bytes=vmem_limit,
        ),
    )(x)

    return out.reshape(T, B, N)


def li_reference(inputs, tau):
    """Pure-JAX reference matching the PyTorch module."""
    decay = 1.0 - 1.0 / tau

    def step(carry, x_t):
        flt, mem = carry
        new_mem = decay * mem + flt
        return (x_t, new_mem), new_mem

    zeros = jnp.zeros(inputs.shape[1:], inputs.dtype)
    _, mem_rec = jax.lax.scan(step, (zeros, zeros), inputs)
    return mem_rec  # (T, B, N)


if __name__ == "__main__":
    tau = 5.0
    key = jax.random.PRNGKey(0)
    k1, k2, k3, k4 = jax.random.split(key, 4)

    # 1) Small shape implied by the module: seq=8, batch=2, hidden=128.
    x = jax.random.normal(k1, (8, 2, 128), dtype=jnp.float32)
    out = jax.block_until_ready(li_forward(x, tau))
    assert out.shape == x.shape
    assert jnp.allclose(out, li_reference(x, tau), atol=1e-5, rtol=1e-5)

    # 2) Longer sequence, single big time chunk (no pad / slice anywhere).
    x2 = jax.random.normal(k2, (300, 2, 128), dtype=jnp.float32)
    out2 = jax.block_until_ready(li_forward(x2, tau))
    assert jnp.allclose(out2, li_reference(x2, tau), atol=1e-4, rtol=1e-4)

    # 3) Multi-chunk cross-chunk carry (chunk divides T exactly: tt=60, 5 chunks).
    out2b = jax.block_until_ready(li_forward(x2, tau, max_time_chunk=64))
    assert jnp.allclose(out2b, li_reference(x2, tau), atol=1e-4, rtol=1e-4)

    # 4) Ragged tail: prime T with no divisor near the cap -> partial last block.
    x3 = jax.random.normal(k3, (37, 2, 128), dtype=jnp.float32)
    out3 = jax.block_until_ready(li_forward(x3, tau, max_time_chunk=16))
    assert jnp.allclose(out3, li_reference(x3, tau), atol=1e-5, rtol=1e-5)

    # 5) Two parallel feature blocks (M = B*N/128 = 16 -> tm = 8, 2 blocks).
    x4 = jax.random.normal(k4, (16, 8, 256), dtype=jnp.float32)
    out4 = jax.block_until_ready(li_forward(x4, tau))
    assert jnp.allclose(out4, li_reference(x4, tau), atol=1e-5, rtol=1e-5)

    # 6) Non-lane-aligned fallback layout (B*N % 128 != 0).
    x5 = jax.random.normal(k1, (10, 3, 100), dtype=jnp.float32)
    out5 = jax.block_until_ready(li_forward(x5, tau))
    assert jnp.allclose(out5, li_reference(x5, tau), atol=1e-5, rtol=1e-5)

    print("KERNEL_OK")
</pallas_src>

<mosaic_0001>
module attributes {stable_mosaic.version = 11 : i64} {
  func.func @_li_kernel(%arg0: i32, %arg1: i32, %arg2: memref<8x2x128xf32, #tpu.memory_space<vmem>>, %arg3: memref<8x2x128xf32, #tpu.memory_space<vmem>>, %arg4: memref<2x128xf32, #tpu.memory_space<vmem>>) attributes {dimension_semantics = [#tpu.dimension_semantics<parallel>, #tpu.dimension_semantics<arbitrary>], iteration_bounds = array<i64: 1, 1>, scalar_prefetch = 0 : i64, scratch_operands = 1 : i64, tpu.core_type = #tpu.core_type<tc>, window_params = [{transform_indices = @transform_0, window_bounds = array<i64: 8, 2, 128>}, {transform_indices = @transform_1, window_bounds = array<i64: 8, 2, 128>}]} {
    %c0_i32 = arith.constant 0 : i32
    %0 = arith.cmpi eq, %arg1, %c0_i32 : i32
    %1 = arith.extui %0 : i1 to i32
    %c0_i32_0 = arith.constant 0 : i32
    %2 = arith.cmpi ne, %1, %c0_i32_0 : i32
    scf.if %2 {
      %cst_52 = arith.constant 0.000000e+00 : f32
      %90 = vector.broadcast %cst_52 : f32 to vector<2x128xf32>
      %c0_53 = arith.constant 0 : index
      %c0_54 = arith.constant 0 : index
      %91 = vector.load %arg4[%c0_53, %c0_54] : memref<2x128xf32, #tpu.memory_space<vmem>>, vector<2x128xf32>
      tpu.vector_store %arg4[%c0_53, %c0_54], %90 {strides = array<i32>} : memref<2x128xf32, #tpu.memory_space<vmem>>, vector<2x128xf32>,
    } else {
    }
    %c0 = arith.constant 0 : index
    %c0_1 = arith.constant 0 : index
    %3 = vector.load %arg4[%c0, %c0_1] : memref<2x128xf32, #tpu.memory_space<vmem>>, vector<2x128xf32>
    %c0_2 = arith.constant 0 : index
    %c0_3 = arith.constant 0 : index
    %c0_4 = arith.constant 0 : index
    %4 = vector.load %arg3[%c0_2, %c0_3, %c0_4] : memref<8x2x128xf32, #tpu.memory_space<vmem>>, vector<1x2x128xf32>
    %5 = vector.shape_cast %4 : vector<1x2x128xf32> to vector<2x128xf32>
    %6 = vector.shape_cast %3 : vector<2x128xf32> to vector<1x2x128xf32>
    tpu.vector_store %arg3[%c0_2, %c0_3, %c0_4], %6 {strides = array<i32>} : memref<8x2x128xf32, #tpu.memory_space<vmem>>, vector<1x2x128xf32>,
    %c1_i32 = arith.constant 1 : i32
    %cst = arith.constant 8.000000e-01 : f32
    %7 = vector.broadcast %cst : f32 to vector<2x128xf32>
    %8 = arith.mulf %7, %3 : vector<2x128xf32>
    %c1_i32_5 = arith.constant 1 : i32
    %9 = arith.subi %c1_i32, %c1_i32_5 : i32
    %10 = arith.index_cast %9 : i32 to index
    %c0_6 = arith.constant 0 : index
    %c0_7 = arith.constant 0 : index
    %11 = vector.load %arg2[%10, %c0_6, %c0_7] : memref<8x2x128xf32, #tpu.memory_space<vmem>>, vector<1x2x128xf32>
    %12 = vector.shape_cast %11 : vector<1x2x128xf32> to vector<2x128xf32>
    %13 = arith.addf %8, %12 : vector<2x128xf32>
    %14 = arith.index_cast %c1_i32 : i32 to index
    %c0_8 = arith.constant 0 : index
    %c0_9 = arith.constant 0 : index
    %15 = vector.load %arg3[%14, %c0_8, %c0_9] : memref<8x2x128xf32, #tpu.memory_space<vmem>>, vector<1x2x128xf32>
    %16 = vector.shape_cast %15 : vector<1x2x128xf32> to vector<2x128xf32>
    %17 = vector.shape_cast %13 : vector<2x128xf32> to vector<1x2x128xf32>
    tpu.vector_store %arg3[%14, %c0_8, %c0_9], %17 {strides = array<i32>} : memref<8x2x128xf32, #tpu.memory_space<vmem>>, vector<1x2x128xf32>,
    %c2_i32 = arith.constant 2 : i32
    %cst_10 = arith.constant 8.000000e-01 : f32
    %18 = vector.broadcast %cst_10 : f32 to vector<2x128xf32>
    %19 = arith.mulf %18, %13 : vector<2x128xf32>
    %c1_i32_11 = arith.constant 1 : i32
    %20 = arith.subi %c2_i32, %c1_i32_11 : i32
    %21 = arith.index_cast %20 : i32 to index
    %c0_12 = arith.constant 0 : index
    %c0_13 = arith.constant 0 : index
    %22 = vector.load %arg2[%21, %c0_12, %c0_13] : memref<8x2x128xf32, #tpu.memory_space<vmem>>, vector<1x2x128xf32>
    %23 = vector.shape_cast %22 : vector<1x2x128xf32> to vector<2x128xf32>
    %24 = arith.addf %19, %23 : vector<2x128xf32>
    %25 = arith.index_cast %c2_i32 : i32 to index
    %c0_14 = arith.constant 0 : index
    %c0_15 = arith.constant 0 : index
    %26 = vector.load %arg3[%25, %c0_14, %c0_15] : memref<8x2x128xf32, #tpu.memory_space<vmem>>, vector<1x2x128xf32>
    %27 = vector.shape_cast %26 : vector<1x2x128xf32> to vector<2x128xf32>
    %28 = vector.shape_cast %24 : vector<2x128xf32> to vector<1x2x128xf32>
    tpu.vector_store %arg3[%25, %c0_14, %c0_15], %28 {strides = array<i32>} : memref<8x2x128xf32, #tpu.memory_space<vmem>>, vector<1x2x128xf32>,
    %c3_i32 = arith.constant 3 : i32
    %cst_16 = arith.constant 8.000000e-01 : f32
    %29 = vector.broadcast %cst_16 : f32 to vector<2x128xf32>
    %30 = arith.mulf %29, %24 : vector<2x128xf32>
    %c1_i32_17 = arith.constant 1 : i32
    %31 = arith.subi %c3_i32, %c1_i32_17 : i32
    %32 = arith.index_cast %31 : i32 to index
    %c0_18 = arith.constant 0 : index
    %c0_19 = arith.constant 0 : index
    %33 = vector.load %arg2[%32, %c0_18, %c0_19] : memref<8x2x128xf32, #tpu.memory_space<vmem>>, vector<1x2x128xf32>
    %34 = vector.shape_cast %33 : vector<1x2x128xf32> to vector<2x128xf32>
    %35 = arith.addf %30, %34 : vector<2x128xf32>
    %36 = arith.index_cast %c3_i32 : i32 to index
    %c0_20 = arith.constant 0 : index
    %c0_21 = arith.constant 0 : index
    %37 = vector.load %arg3[%36, %c0_20, %c0_21] : memref<8x2x128xf32, #tpu.memory_space<vmem>>, vector<1x2x128xf32>
    %38 = vector.shape_cast %37 : vector<1x2x128xf32> to vector<2x128xf32>
    %39 = vector.shape_cast %35 : vector<2x128xf32> to vector<1x2x128xf32>
    tpu.vector_store %arg3[%36, %c0_20, %c0_21], %39 {strides = array<i32>} : memref<8x2x128xf32, #tpu.memory_space<vmem>>, vector<1x2x128xf32>,
    %c4_i32 = arith.constant 4 : i32
    %cst_22 = arith.constant 8.000000e-01 : f32
    %40 = vector.broadcast %cst_22 : f32 to vector<2x128xf32>
    %41 = arith.mulf %40, %35 : vector<2x128xf32>
    %c1_i32_23 = arith.constant 1 : i32
    %42 = arith.subi %c4_i32, %c1_i32_23 : i32
    %43 = arith.index_cast %42 : i32 to index
    %c0_24 = arith.constant 0 : index
    %c0_25 = arith.constant 0 : index
    %44 = vector.load %arg2[%43, %c0_24, %c0_25] : memref<8x2x128xf32, #tpu.memory_space<vmem>>, vector<1x2x128xf32>
    %45 = vector.shape_cast %44 : vector<1x2x128xf32> to vector<2x128xf32>
    %46 = arith.addf %41, %45 : vector<2x128xf32>
    %47 = arith.index_cast %c4_i32 : i32 to index
    %c0_26 = arith.constant 0 : index
    %c0_27 = arith.constant 0 : index
    %48 = vector.load %arg3[%47, %c0_26, %c0_27] : memref<8x2x128xf32, #tpu.memory_space<vmem>>, vector<1x2x128xf32>
    %49 = vector.shape_cast %48 : vector<1x2x128xf32> to vector<2x128xf32>
    %50 = vector.shape_cast %46 : vector<2x128xf32> to vector<1x2x128xf32>
    tpu.vector_store %arg3[%47, %c0_26, %c0_27], %50 {strides = array<i32>} : memref<8x2x128xf32, #tpu.memory_space<vmem>>, vector<1x2x128xf32>,
    %c5_i32 = arith.constant 5 : i32
    %cst_28 = arith.constant 8.000000e-01 : f32
    %51 = vector.broadcast %cst_28 : f32 to vector<2x128xf32>
    %52 = arith.mulf %51, %46 : vector<2x128xf32>
    %c1_i32_29 = arith.constant 1 : i32
    %53 = arith.subi %c5_i32, %c1_i32_29 : i32
    %54 = arith.index_cast %53 : i32 to index
    %c0_30 = arith.constant 0 : index
    %c0_31 = arith.constant 0 : index
    %55 = vector.load %arg2[%54, %c0_30, %c0_31] : memref<8x2x128xf32, #tpu.memory_space<vmem>>, vector<1x2x128xf32>
    %56 = vector.shape_cast %55 : vector<1x2x128xf32> to vector<2x128xf32>
    %57 = arith.addf %52, %56 : vector<2x128xf32>
    %58 = arith.index_cast %c5_i32 : i32 to index
    %c0_32 = arith.constant 0 : index
    %c0_33 = arith.constant 0 : index
    %59 = vector.load %arg3[%58, %c0_32, %c0_33] : memref<8x2x128xf32, #tpu.memory_space<vmem>>, vector<1x2x128xf32>
    %60 = vector.shape_cast %59 : vector<1x2x128xf32> to vector<2x128xf32>
    %61 = vector.shape_cast %57 : vector<2x128xf32> to vector<1x2x128xf32>
    tpu.vector_store %arg3[%58, %c0_32, %c0_33], %61 {strides = array<i32>} : memref<8x2x128xf32, #tpu.memory_space<vmem>>, vector<1x2x128xf32>,
    %c6_i32 = arith.constant 6 : i32
    %cst_34 = arith.constant 8.000000e-01 : f32
    %62 = vector.broadcast %cst_34 : f32 to vector<2x128xf32>
    %63 = arith.mulf %62, %57 : vector<2x128xf32>
    %c1_i32_35 = arith.constant 1 : i32
    %64 = arith.subi %c6_i32, %c1_i32_35 : i32
    %65 = arith.index_cast %64 : i32 to index
    %c0_36 = arith.constant 0 : index
    %c0_37 = arith.constant 0 : index
    %66 = vector.load %arg2[%65, %c0_36, %c0_37] : memref<8x2x128xf32, #tpu.memory_space<vmem>>, vector<1x2x128xf32>
    %67 = vector.shape_cast %66 : vector<1x2x128xf32> to vector<2x128xf32>
    %68 = arith.addf %63, %67 : vector<2x128xf32>
    %69 = arith.index_cast %c6_i32 : i32 to index
    %c0_38 = arith.constant 0 : index
    %c0_39 = arith.constant 0 : index
    %70 = vector.load %arg3[%69, %c0_38, %c0_39] : memref<8x2x128xf32, #tpu.memory_space<vmem>>, vector<1x2x128xf32>
    %71 = vector.shape_cast %70 : vector<1x2x128xf32> to vector<2x128xf32>
    %72 = vector.shape_cast %68 : vector<2x128xf32> to vector<1x2x128xf32>
    tpu.vector_store %arg3[%69, %c0_38, %c0_39], %72 {strides = array<i32>} : memref<8x2x128xf32, #tpu.memory_space<vmem>>, vector<1x2x128xf32>,
    %c7_i32 = arith.constant 7 : i32
    %cst_40 = arith.constant 8.000000e-01 : f32
    %73 = vector.broadcast %cst_40 : f32 to vector<2x128xf32>
    %74 = arith.mulf %73, %68 : vector<2x128xf32>
    %c1_i32_41 = arith.constant 1 : i32
    %75 = arith.subi %c7_i32, %c1_i32_41 : i32
    %76 = arith.index_cast %75 : i32 to index
    %c0_42 = arith.constant 0 : index
    %c0_43 = arith.constant 0 : index
    %77 = vector.load %arg2[%76, %c0_42, %c0_43] : memref<8x2x128xf32, #tpu.memory_space<vmem>>, vector<1x2x128xf32>
    %78 = vector.shape_cast %77 : vector<1x2x128xf32> to vector<2x128xf32>
    %79 = arith.addf %74, %78 : vector<2x128xf32>
    %80 = arith.index_cast %c7_i32 : i32 to index
    %c0_44 = arith.constant 0 : index
    %c0_45 = arith.constant 0 : index
    %81 = vector.load %arg3[%80, %c0_44, %c0_45] : memref<8x2x128xf32, #tpu.memory_space<vmem>>, vector<1x2x128xf32>
    %82 = vector.shape_cast %81 : vector<1x2x128xf32> to vector<2x128xf32>
    %83 = vector.shape_cast %79 : vector<2x128xf32> to vector<1x2x128xf32>
    tpu.vector_store %arg3[%80, %c0_44, %c0_45], %83 {strides = array<i32>} : memref<8x2x128xf32, #tpu.memory_space<vmem>>, vector<1x2x128xf32>,
    %c7_i32_46 = arith.constant 7 : i32
    %cst_47 = arith.constant 8.000000e-01 : f32
    %84 = vector.broadcast %cst_47 : f32 to vector<2x128xf32>
    %85 = arith.mulf %84, %79 : vector<2x128xf32>
    %c7 = arith.constant 7 : index
    %c0_48 = arith.constant 0 : index
    %c0_49 = arith.constant 0 : index
    %86 = vector.load %arg2[%c7, %c0_48, %c0_49] : memref<8x2x128xf32, #tpu.memory_space<vmem>>, vector<1x2x128xf32>
    %87 = vector.shape_cast %86 : vector<1x2x128xf32> to vector<2x128xf32>
    %88 = arith.addf %85, %87 : vector<2x128xf32>
    %c0_50 = arith.constant 0 : index
    %c0_51 = arith.constant 0 : index
    %89 = vector.load %arg4[%c0_50, %c0_51] : memref<2x128xf32, #tpu.memory_space<vmem>>, vector<2x128xf32>
    tpu.vector_store %arg4[%c0_50, %c0_51], %88 {strides = array<i32>} : memref<2x128xf32, #tpu.memory_space<vmem>>, vector<2x128xf32>,
    return
  }
  func.func @transform_0(%arg0: i32, %arg1: i32) -> (i32, i32, i32) {
    %c0_i32 = arith.constant 0 : i32
    %c0_i32_0 = arith.constant 0 : i32
    return %arg1, %arg0, %c0_i32 : i32, i32, i32
  }
  func.func @transform_1(%arg0: i32, %arg1: i32) -> (i32, i32, i32) {
    %c0_i32 = arith.constant 0 : i32
    %c0_i32_0 = arith.constant 0 : i32
    return %arg1, %arg0, %c0_i32 : i32, i32, i32
  }
}

</mosaic_0001>

<llo_original>
// kernel: tpu_custom_call.1
$region0: #{tpu_custom_call.1}
  #allocation0 [shape = 'u32[]', space=smem, size = 0x4, offset = 0x4, fixed_abs, tag = 'smem constant byte address 0x4 - core index']
  #allocation1 [shape = 'u32[144,128]{1,0:T(1,128)}', space=vmem, size = 0x12000, scoped, tag = 'internal scratch']
  #allocation2 [shape = 'f32[2,128]{1,0:T(2,128)}', space=vmem, size = 0x400, scoped, tag = 'scratch operand']
  %s0 = inlined_call_operand.hbm [shape: f32[8,2,128], index: 0, kind: input, shape index: {}]
  %s1 = inlined_call_operand.hbm [shape: f32[8,2,128], index: 1, kind: output, shape index: {}]
  %s2 = sld [smem:[#allocation0]]
  $region22: #{tpu_custom_call.1} parent=0
    _
  %s4 = ssub.s32 1, %s2
  %s5 = scalar_select 0, %s4, %s2
  $region1: #{tpu_custom_call.1} parent=0
    #allocation3 [shape = 'u8[8192]{0}', space=vmem, size = 0x2000, scoped, tag = 'input window, operand 0, single buffered']
    #allocation4 [shape = 's32[1]{0}', space=sflag, size = 0x4, scoped, tag = 'scoped memory for tpu_custom_call.1']
    #allocation5 [shape = 's32[1]{0}', space=sflag, size = 0x4, scoped, tag = 'scoped memory for tpu_custom_call.1']
    #allocation6 [shape = 'u8[8192]{0}', space=vmem, size = 0x2000, scoped, tag = 'output window, operand 0, single buffered']
    %6 = vsyncpa [#allocation4], 0
    %7 = vsyncpa [#allocation5], 0
    // Predicated region
    $region2: #{tpu_custom_call.1} parent=1 // pred_check
      _
    $region3: #{tpu_custom_call.1} parent=1 // pred_check_branch
      %9 = sbr.rel (0) target = $region5
    $region4: #{tpu_custom_call.1} parent=1 // pred_region
      %s11 = ssub.s32 256, 256
      %12 = vsyncadd [#allocation4], %s11
      %s13 = sshll.u32 [#allocation3], 4
      %s14 = int_to_ptr.vmem [resolvable:$true] %s13
      %19 = dma.hbm_to_vmem [thread:$0]  %s0, 256, %s14, [#allocation4], 32, 32, 2
    $region5: #{tpu_custom_call.1} parent=1 // pred_fallthru
      _
    // Predicated region
    $region6: #{tpu_custom_call.1} parent=1 // pred_check
      _
    $region7: #{tpu_custom_call.1} parent=1 // pred_check_branch
      %21 = sbr.rel (0) target = $region9
    $region8: #{tpu_custom_call.1} parent=1 // pred_region
      %22 = dma.done [#allocation4], 256
    $region9: #{tpu_custom_call.1} parent=1 // pred_fallthru
      _
    %p23 = scmp.eq.s32.totalorder 0, 0
    // Predicated region
    $region10: #{tpu_custom_call.1} parent=1 // pred_check
      %p24 = pneg %p23
    $region11: #{tpu_custom_call.1} parent=1 // pred_check_branch
      %26 = sbr.rel (%p24) target = $region13
    $region12: #{tpu_custom_call.1} parent=1 // pred_region
      %27 = vst [vmem:[#allocation2] sm:$0x3] 0.0
    $region13: #{tpu_custom_call.1} parent=1 // pred_fallthru
      _
    %v28 = vld [vmem:[#allocation2] sm:$0x3]
    %29 = vst [vmem:[#allocation6] sm:$0x3] %v28
    %v30 = vmul.f32 %v28, 0.8
    %v31 = vld [vmem:[#allocation3] sm:$0x3]
    %v32 = vadd.f32 %v30, %v31
    %s33 = scalar_lea.vmem [#allocation6], 2
    %34 = vst [vmem:[%s33] sm:$0x3] %v32
    %v35 = vmul.f32 %v32, 0.8
    %s36 = scalar_lea.vmem [#allocation3], 2
    %v37 = vld [vmem:[%s36] sm:$0x3]
    %v38 = vadd.f32 %v35, %v37
    %s39 = scalar_lea.vmem [#allocation6], 4
    %40 = vst [vmem:[%s39] sm:$0x3] %v38
    %v41 = vmul.f32 %v38, 0.8
    %s42 = scalar_lea.vmem [#allocation3], 4
    %v43 = vld [vmem:[%s42] sm:$0x3]
    %v44 = vadd.f32 %v41, %v43
    %s45 = scalar_lea.vmem [#allocation6], 6
    %46 = vst [vmem:[%s45] sm:$0x3] %v44
    %v47 = vmul.f32 %v44, 0.8
    %s48 = scalar_lea.vmem [#allocation3], 6
    %v49 = vld [vmem:[%s48] sm:$0x3]
    %v50 = vadd.f32 %v47, %v49
    %s51 = scalar_lea.vmem [#allocation6], 8
    %52 = vst [vmem:[%s51] sm:$0x3] %v50
    %v53 = vmul.f32 %v50, 0.8
    %s54 = scalar_lea.vmem [#allocation3], 8
    %v55 = vld [vmem:[%s54] sm:$0x3]
    %v56 = vadd.f32 %v53, %v55
    %s57 = scalar_lea.vmem [#allocation6], 10
    %58 = vst [vmem:[%s57] sm:$0x3] %v56
    %v59 = vmul.f32 %v56, 0.8
    %s60 = scalar_lea.vmem [#allocation3], 10
    %v61 = vld [vmem:[%s60] sm:$0x3]
    %v62 = vadd.f32 %v59, %v61
    %s63 = scalar_lea.vmem [#allocation6], 12
    %64 = vst [vmem:[%s63] sm:$0x3] %v62
    %v65 = vmul.f32 %v62, 0.8
    %s66 = scalar_lea.vmem [#allocation3], 12
    %v67 = vld [vmem:[%s66] sm:$0x3]
    %v68 = vadd.f32 %v65, %v67
    %s69 = scalar_lea.vmem [#allocation6], 14
    %70 = vst [vmem:[%s69] sm:$0x3] %v68
    %v71 = vmul.f32 %v68, 0.8
    %s72 = scalar_lea.vmem [#allocation3], 14
    %v73 = vld [vmem:[%s72] sm:$0x3]
    %v74 = vadd.f32 %v71, %v73
    %75 = vst [vmem:[#allocation2] sm:$0x3] %v74
    // Predicated region
    $region14: #{tpu_custom_call.1} parent=1 // pred_check
      _
    $region15: #{tpu_custom_call.1} parent=1 // pred_check_branch
      %77 = sbr.rel (0) target = $region17
    $region16: #{tpu_custom_call.1} parent=1 // pred_region
      %s79 = ssub.s32 256, 256
      %80 = vsyncadd [#allocation5], %s79
      %s81 = sshll.u32 [#allocation6], 4
      %s82 = int_to_ptr.vmem [resolvable:$true] %s81
      %87 = dma.vmem_to_hbm [thread:$0]  %s82, 256, %s1, [#allocation5], 32, 32, 2
    $region17: #{tpu_custom_call.1} parent=1 // pred_fallthru
      _
    // Predicated region
    $region18: #{tpu_custom_call.1} parent=1 // pred_check
      _
    $region19: #{tpu_custom_call.1} parent=1 // pred_check_branch
      %89 = sbr.rel (0) target = $region21
    $region20: #{tpu_custom_call.1} parent=1 // pred_region
      %90 = dma.done [#allocation5], 256
    $region21: #{tpu_custom_call.1} parent=1 // pred_fallthru
      _
    %91 = vsyncpa [#allocation4], 1
    %92 = vsyncpa [#allocation5], 1

</llo_original>
